<compile_context>
chip_gen: v5e
topology: v5e:2x2
jax: 0.10.0
libtpu: 0.0.40
codegen_flags: <defaults>
</compile_context>

<pallas_src>
import math
import functools

import jax
import jax.numpy as jnp
from jax.experimental import pallas as pl
from jax.experimental.pallas import tpu as pltpu


def _shapely_attn_kernel(x_ref, emb_ref, mask_ref, w_all_ref, se_ref, wo_ref,
                         out_ref, *, n_agents, sample_num, emb_dim):
    """One program = a lane-dense (TB, n_agents*emb_dim) slab of B*T rows.

    Lane layout: lane = n*emb_dim + h*head_dim + d  (agent n, head h, dim d).
    """
    f = n_agents * emb_dim

    # Agent-embedding add (row broadcast over the TB rows), kept in f32.
    x = x_ref[...] + emb_ref[...]                               # (TB, f)

    # One fused bf16 MXU matmul produces, along the output lanes:
    #   [:, 0:f]                          Q (block-diag Wq, scale folded in)
    #   [:, f*(1+m)     : f*(2+m)]        K of key-agent m, replicated per agent block
    #   [:, f*(1+n_a+m) : f*(2+n_a+m)]    V of key-agent m, replicated per agent block
    # TODO(synk): for large n_agents on MXU-bound v5e, de-replicate K/V in the
    # weight (w_all width 3f instead of (1+2*n_a)f) and tile the e-lane slices
    # in-kernel; at e=32 those slices cross the 128-lane tile so the lane-copy
    # cost roughly offsets the MXU saving here and it is kept folded.
    qkv = jnp.dot(x.astype(jnp.bfloat16), w_all_ref[...],
                  preferred_element_type=jnp.float32)           # (TB, (1+2*n_a)*f)

    q = qkv[:, :f]                                              # already * 1/sqrt(hd)
    se = se_ref[...]                                            # bf16 (f, f) 0/1 head sum+expand

    # Per key-agent scores, already re-expanded over the head-dim lanes:
    #   scores[m][:, n*e + h*hd + d] = scale * sum_d' q[n,h,d'] k[m,h,d'].
    # Score-reduction dots run in bf16 (se is 0/1 -> exact), f32 accumulation.
    scores = []
    for m in range(n_agents):
        k_m = qkv[:, f * (1 + m): f * (2 + m)]
        prod = (q * k_m).astype(jnp.bfloat16)
        scores.append(jnp.dot(prod, se, preferred_element_type=jnp.float32))

    # --- softmax, hoisted out of the coalition-sample loop (all f32) ---------
    # Global max over key agents: exact (shift invariance); the coalition-mask
    # diagonal is forced to 1 so every query always has >= 1 unmasked key.
    mx = scores[0]
    for m in range(1, n_agents):
        mx = jnp.maximum(mx, scores[m])
    ex = [jnp.exp(scores[m] - mx) for m in range(n_agents)]     # n_a exp passes total

    shape = ex[0].shape
    # c[m] = sum_s mask01[s, m] / denom_s  (probability coefficient, summed over
    # the sample_num coalition masks; ex[m] is factored out of the sample loop).
    coeff = [jnp.zeros(shape, jnp.float32) for _ in range(n_agents)]
    for s in range(sample_num):
        # Hoisted (1, f) -> (TB, f) mask broadcasts, reused for denom and coeff.
        mrows = []
        for m in range(n_agents):
            r = s * n_agents + m
            mrows.append(jnp.broadcast_to(mask_ref[r:r + 1, :], shape))
        denom = mrows[0] * ex[0]
        for m in range(1, n_agents):
            denom = denom + mrows[m] * ex[m]
        inv = pl.reciprocal(denom, approx=False)                # exact: matches f32 reference
        for m in range(n_agents):
            coeff[m] = coeff[m] + mrows[m] * inv

    # Attention-weighted values: weights replicated over head-dim lanes and V
    # replicated per agent block, so this is pure elementwise multiply-add.
    o = (ex[0] * coeff[0]) * qkv[:, f * (1 + n_agents): f * (2 + n_agents)]
    for m in range(1, n_agents):
        v_m = qkv[:, f * (1 + n_agents + m): f * (2 + n_agents + m)]
        o = o + (ex[m] * coeff[m]) * v_m

    # Output projection (block-diagonal Wo / sample_num), lane-dense f32 store.
    out_ref[...] = jnp.dot(o.astype(jnp.bfloat16), wo_ref[...],
                           preferred_element_type=jnp.float32)


def _round_up(x, m):
    return (x + m - 1) // m * m


def _cdiv(a, b):
    return -(-a // b)


@functools.partial(jax.jit, static_argnames=("n_heads", "sample_num"))
def shapely_attention_forward(x, agent_temporal_mask, params, *, n_heads,
                              sample_num, key):
    """JAX/Pallas equivalent of ShapelyAttention.forward.

    x: (b, n_a, t, e) float32.  Returns (b, n_a, t, e) float32.
    """
    del agent_temporal_mask  # unused in the reference forward
    b, n_a, t, e = x.shape
    assert e % n_heads == 0
    f = n_a * e
    bt = b * t
    hd = e // n_heads

    # ---- glue (plain JAX, fused under jit): layout + random coalition/masks ----
    # TODO(synk): the (0,2,1,3) transpose round-trip could be removed by keeping
    # the surrounding layout as (b, t, n_a, e); kept here to match the module API.
    x_flat = jnp.transpose(x, (0, 2, 1, 3)).reshape(bt, f)

    k_coal, k_mask = jax.random.split(key)
    coalition = jax.random.permutation(k_coal, n_a)
    emb_flat = params["agent_embedding"][coalition].reshape(1, f)

    raw = jax.random.bernoulli(k_mask, 0.5, (sample_num, n_a, n_a)).astype(jnp.float32)
    eye = jnp.eye(n_a, dtype=jnp.float32)
    masks = raw - raw * eye[None] + eye[None]                   # diagonal forced to 1
    # Multiplicative 0/1 masks pre-expanded to the flat lane layout:
    #   mask01[s*n_a + m, n*e + c] = 1 if query-agent n may attend key-agent m.
    mask01 = jnp.broadcast_to(jnp.transpose(masks, (0, 2, 1))[..., None],
                              (sample_num, n_a, n_a, e)).reshape(sample_num * n_a, f)

    # ---- fused / block-structured weights (tiny, built once per call) ----
    eye_a = jnp.eye(n_a, dtype=jnp.float32)
    ones_row = jnp.ones((1, n_a), dtype=jnp.float32)
    scale = 1.0 / math.sqrt(float(hd))
    wq_blk = jnp.kron(eye_a, params["wq"] * scale)                # (f, f), scale folded in
    wk_rep = jnp.kron(eye_a, jnp.kron(ones_row, params["wk"]))    # (f, n_a*f) replicated K
    wv_rep = jnp.kron(eye_a, jnp.kron(ones_row, params["wv"]))    # (f, n_a*f) replicated V
    w_all = jnp.concatenate([wq_blk, wk_rep, wv_rep], axis=1).astype(jnp.bfloat16)
    se = jnp.kron(jnp.eye(n_a * n_heads, dtype=jnp.float32),
                  jnp.ones((hd, hd), jnp.float32)).astype(jnp.bfloat16)  # 0/1 -> exact bf16
    wo_blk = (jnp.kron(eye_a, params["wo"]) / float(sample_num)).astype(jnp.bfloat16)

    # ---- tiling over the B*T axis (large TB => big matmuls / DMAs, amortized
    # per-step overhead).  TB<=1024 keeps f32 temporaries well inside 32 MiB of
    # VMEM even on v7x (64 MiB per TensorCore).  When there is more than one
    # grid step, shrink TB so the step count is even (both v7x cores get work).
    tb = min(1024, _round_up(bt, 8))
    steps = _cdiv(bt, tb)
    if steps > 1 and steps % 2 == 1:
        tb = _round_up(_cdiv(bt, steps + 1), 8)
        steps = _cdiv(bt, tb)
    bt_pad = steps * tb
    if bt_pad != bt:
        x_flat = jnp.pad(x_flat, ((0, bt_pad - bt), (0, 0)))
    grid = (steps,)

    kernel = functools.partial(_shapely_attn_kernel, n_agents=n_a,
                               sample_num=sample_num, emb_dim=e)
    out_flat = pl.pallas_call(
        kernel,
        out_shape=jax.ShapeDtypeStruct((bt_pad, f), jnp.float32),
        grid_spec=pltpu.PrefetchScalarGridSpec(
            num_scalar_prefetch=0,
            grid=grid,
            in_specs=[
                pl.BlockSpec((tb, f), lambda i: (i, 0)),                 # x slab
                pl.BlockSpec((1, f), lambda i: (0, 0)),                  # agent embedding
                pl.BlockSpec((sample_num * n_a, f), lambda i: (0, 0)),   # 0/1 coalition masks
                pl.BlockSpec((f, (1 + 2 * n_a) * f), lambda i: (0, 0)),  # fused QKV weight
                pl.BlockSpec((f, f), lambda i: (0, 0)),                  # head-sum/expand (0/1)
                pl.BlockSpec((f, f), lambda i: (0, 0)),                  # Wo (block diag)
            ],
            out_specs=pl.BlockSpec((tb, f), lambda i: (i, 0)),
        ),
        compiler_params=pltpu.CompilerParams(
            dimension_semantics=("parallel",),
            vmem_limit_bytes=32 * 1024 * 1024),
    )(x_flat, emb_flat, mask01, w_all, se, wo_blk)

    out = out_flat[:bt].reshape(b, t, n_a, e)
    return jnp.transpose(out, (0, 2, 1, 3))


def init_params(key, emb_dim, n_agents):
    ks = jax.random.split(key, 5)
    s = 1.0 / math.sqrt(emb_dim)
    return {
        "agent_embedding": jax.random.normal(ks[0], (n_agents, emb_dim), jnp.float32),
        "wq": jax.random.normal(ks[1], (emb_dim, emb_dim), jnp.float32) * s,
        "wk": jax.random.normal(ks[2], (emb_dim, emb_dim), jnp.float32) * s,
        "wv": jax.random.normal(ks[3], (emb_dim, emb_dim), jnp.float32) * s,
        "wo": jax.random.normal(ks[4], (emb_dim, emb_dim), jnp.float32) * s,
    }


if __name__ == "__main__":
    # Small, forward-consistent shapes (b*t rows of (n_agents, emb) attention).
    b, n_agents, t, emb_dim = 2, 4, 8, 32
    n_heads, sample_num = 4, 2

    root = jax.random.PRNGKey(0)
    k_params, k_input, k_fwd = jax.random.split(root, 3)

    params = init_params(k_params, emb_dim, n_agents)
    x = jax.random.normal(k_input, (b, n_agents, t, emb_dim), jnp.float32)
    agent_temporal_mask = jnp.ones((b, n_agents, t), jnp.float32)  # unused, as in reference

    out = shapely_attention_forward(
        x, agent_temporal_mask, params,
        n_heads=n_heads, sample_num=sample_num, key=k_fwd)
    jax.block_until_ready(out)

    assert out.shape == (b, n_agents, t, emb_dim), out.shape
    assert bool(jnp.all(jnp.isfinite(out)))
    print("KERNEL_OK")
</pallas_src>

<mosaic_0001>
module attributes {stable_mosaic.version = 11 : i64} {
  func.func @_shapely_attn_kernel(%arg0: i32, %arg1: memref<16x128xf32, #tpu.memory_space<vmem>>, %arg2: memref<1x128xf32, #tpu.memory_space<vmem>>, %arg3: memref<8x128xf32, #tpu.memory_space<vmem>>, %arg4: memref<128x1152xbf16, #tpu.memory_space<vmem>>, %arg5: memref<128x128xbf16, #tpu.memory_space<vmem>>, %arg6: memref<128x128xbf16, #tpu.memory_space<vmem>>, %arg7: memref<16x128xf32, #tpu.memory_space<vmem>>) attributes {dimension_semantics = [#tpu.dimension_semantics<parallel>], iteration_bounds = array<i64: 1>, scalar_prefetch = 0 : i64, scratch_operands = 0 : i64, tpu.core_type = #tpu.core_type<tc>, window_params = [{transform_indices = @transform_0, window_bounds = array<i64: 16, 128>}, {pipeline_mode = #tpu.pipeline_mode<synchronous>, transform_indices = @transform_1, window_bounds = array<i64: 1, 128>}, {pipeline_mode = #tpu.pipeline_mode<synchronous>, transform_indices = @transform_2, window_bounds = array<i64: 8, 128>}, {pipeline_mode = #tpu.pipeline_mode<synchronous>, transform_indices = @transform_3, window_bounds = array<i64: 128, 1152>}, {pipeline_mode = #tpu.pipeline_mode<synchronous>, transform_indices = @transform_4, window_bounds = array<i64: 128, 128>}, {pipeline_mode = #tpu.pipeline_mode<synchronous>, transform_indices = @transform_5, window_bounds = array<i64: 128, 128>}, {transform_indices = @transform_6, window_bounds = array<i64: 16, 128>}]} {
    %c0 = arith.constant 0 : index
    %c0_0 = arith.constant 0 : index
    %0 = vector.load %arg1[%c0, %c0_0] : memref<16x128xf32, #tpu.memory_space<vmem>>, vector<16x128xf32>
    %c0_1 = arith.constant 0 : index
    %c0_2 = arith.constant 0 : index
    %1 = vector.load %arg2[%c0_1, %c0_2] : memref<1x128xf32, #tpu.memory_space<vmem>>, vector<1x128xf32>
    %2 = vector.broadcast %1 : vector<1x128xf32> to vector<16x128xf32>
    %3 = arith.addf %0, %2 : vector<16x128xf32>
    %4 = arith.truncf %3 : vector<16x128xf32> to vector<16x128xbf16>
    %c0_3 = arith.constant 0 : index
    %c0_4 = arith.constant 0 : index
    %5 = vector.load %arg4[%c0_3, %c0_4] : memref<128x1152xbf16, #tpu.memory_space<vmem>>, vector<128x1152xbf16>
    %cst = arith.constant dense<0.000000e+00> : vector<16x1152xf32>
    %6 = tpu.matmul %4, %5, %cst {dimension_numbers = #tpu.dot_dimension_numbers<[1], [0], [0], [1], [0, 0, 1, 1], [], []>} : vector<16x128xbf16>, vector<128x1152xbf16>, vector<16x1152xf32> -> vector<16x1152xf32>
    %7 = vector.extract_strided_slice %6 {offsets = [0, 0], sizes = [16, 128], strides = [1, 1]} : vector<16x1152xf32> to vector<16x128xf32>
    %c0_5 = arith.constant 0 : index
    %c0_6 = arith.constant 0 : index
    %8 = vector.load %arg5[%c0_5, %c0_6] : memref<128x128xbf16, #tpu.memory_space<vmem>>, vector<128x128xbf16>
    %9 = vector.extract_strided_slice %6 {offsets = [0, 128], sizes = [16, 128], strides = [1, 1]} : vector<16x1152xf32> to vector<16x128xf32>
    %10 = arith.mulf %7, %9 : vector<16x128xf32>
    %11 = arith.truncf %10 : vector<16x128xf32> to vector<16x128xbf16>
    %cst_7 = arith.constant dense<0.000000e+00> : vector<16x128xf32>
    %12 = tpu.matmul %11, %8, %cst_7 {dimension_numbers = #tpu.dot_dimension_numbers<[1], [0], [0], [1], [0, 0, 1, 1], [], []>} : vector<16x128xbf16>, vector<128x128xbf16>, vector<16x128xf32> -> vector<16x128xf32>
    %13 = vector.extract_strided_slice %6 {offsets = [0, 256], sizes = [16, 128], strides = [1, 1]} : vector<16x1152xf32> to vector<16x128xf32>
    %14 = arith.mulf %7, %13 : vector<16x128xf32>
    %15 = arith.truncf %14 : vector<16x128xf32> to vector<16x128xbf16>
    %cst_8 = arith.constant dense<0.000000e+00> : vector<16x128xf32>
    %16 = tpu.matmul %15, %8, %cst_8 {dimension_numbers = #tpu.dot_dimension_numbers<[1], [0], [0], [1], [0, 0, 1, 1], [], []>} : vector<16x128xbf16>, vector<128x128xbf16>, vector<16x128xf32> -> vector<16x128xf32>
    %17 = vector.extract_strided_slice %6 {offsets = [0, 384], sizes = [16, 128], strides = [1, 1]} : vector<16x1152xf32> to vector<16x128xf32>
    %18 = arith.mulf %7, %17 : vector<16x128xf32>
    %19 = arith.truncf %18 : vector<16x128xf32> to vector<16x128xbf16>
    %cst_9 = arith.constant dense<0.000000e+00> : vector<16x128xf32>
    %20 = tpu.matmul %19, %8, %cst_9 {dimension_numbers = #tpu.dot_dimension_numbers<[1], [0], [0], [1], [0, 0, 1, 1], [], []>} : vector<16x128xbf16>, vector<128x128xbf16>, vector<16x128xf32> -> vector<16x128xf32>
    %21 = vector.extract_strided_slice %6 {offsets = [0, 512], sizes = [16, 128], strides = [1, 1]} : vector<16x1152xf32> to vector<16x128xf32>
    %22 = arith.mulf %7, %21 : vector<16x128xf32>
    %23 = arith.truncf %22 : vector<16x128xf32> to vector<16x128xbf16>
    %cst_10 = arith.constant dense<0.000000e+00> : vector<16x128xf32>
    %24 = tpu.matmul %23, %8, %cst_10 {dimension_numbers = #tpu.dot_dimension_numbers<[1], [0], [0], [1], [0, 0, 1, 1], [], []>} : vector<16x128xbf16>, vector<128x128xbf16>, vector<16x128xf32> -> vector<16x128xf32>
    %25 = arith.maximumf %12, %16 : vector<16x128xf32>
    %26 = arith.maximumf %25, %20 : vector<16x128xf32>
    %27 = arith.maximumf %26, %24 : vector<16x128xf32>
    %28 = arith.subf %12, %27 : vector<16x128xf32>
    %29 = math.exp %28 : vector<16x128xf32>
    %30 = arith.subf %16, %27 : vector<16x128xf32>
    %31 = math.exp %30 : vector<16x128xf32>
    %32 = arith.subf %20, %27 : vector<16x128xf32>
    %33 = math.exp %32 : vector<16x128xf32>
    %34 = arith.subf %24, %27 : vector<16x128xf32>
    %35 = math.exp %34 : vector<16x128xf32>
    %cst_11 = arith.constant 0.000000e+00 : f32
    %36 = vector.broadcast %cst_11 : f32 to vector<16x128xf32>
    %cst_12 = arith.constant 0.000000e+00 : f32
    %37 = vector.broadcast %cst_12 : f32 to vector<16x128xf32>
    %cst_13 = arith.constant 0.000000e+00 : f32
    %38 = vector.broadcast %cst_13 : f32 to vector<16x128xf32>
    %cst_14 = arith.constant 0.000000e+00 : f32
    %39 = vector.broadcast %cst_14 : f32 to vector<16x128xf32>
    %c0_15 = arith.constant 0 : index
    %c0_16 = arith.constant 0 : index
    %40 = vector.load %arg3[%c0_15, %c0_16] : memref<8x128xf32, #tpu.memory_space<vmem>>, vector<1x128xf32>
    %41 = vector.shape_cast %40 : vector<1x128xf32> to vector<1x128xf32>
    %42 = vector.broadcast %41 : vector<1x128xf32> to vector<16x128xf32>
    %c1 = arith.constant 1 : index
    %c0_17 = arith.constant 0 : index
    %43 = vector.load %arg3[%c1, %c0_17] : memref<8x128xf32, #tpu.memory_space<vmem>>, vector<1x128xf32>
    %44 = vector.shape_cast %43 : vector<1x128xf32> to vector<1x128xf32>
    %45 = vector.broadcast %44 : vector<1x128xf32> to vector<16x128xf32>
    %c2 = arith.constant 2 : index
    %c0_18 = arith.constant 0 : index
    %46 = vector.load %arg3[%c2, %c0_18] : memref<8x128xf32, #tpu.memory_space<vmem>>, vector<1x128xf32>
    %47 = vector.shape_cast %46 : vector<1x128xf32> to vector<1x128xf32>
    %48 = vector.broadcast %47 : vector<1x128xf32> to vector<16x128xf32>
    %c3 = arith.constant 3 : index
    %c0_19 = arith.constant 0 : index
    %49 = vector.load %arg3[%c3, %c0_19] : memref<8x128xf32, #tpu.memory_space<vmem>>, vector<1x128xf32>
    %50 = vector.shape_cast %49 : vector<1x128xf32> to vector<1x128xf32>
    %51 = vector.broadcast %50 : vector<1x128xf32> to vector<16x128xf32>
    %52 = arith.mulf %42, %29 : vector<16x128xf32>
    %53 = arith.mulf %45, %31 : vector<16x128xf32>
    %54 = arith.addf %52, %53 : vector<16x128xf32>
    %55 = arith.mulf %48, %33 : vector<16x128xf32>
    %56 = arith.addf %54, %55 : vector<16x128xf32>
    %57 = arith.mulf %51, %35 : vector<16x128xf32>
    %58 = arith.addf %56, %57 : vector<16x128xf32>
    %59 = tpu.reciprocal %58 : vector<16x128xf32> -> vector<16x128xf32>
    %60 = arith.mulf %42, %59 : vector<16x128xf32>
    %61 = arith.addf %36, %60 : vector<16x128xf32>
    %62 = arith.mulf %45, %59 : vector<16x128xf32>
    %63 = arith.addf %37, %62 : vector<16x128xf32>
    %64 = arith.mulf %48, %59 : vector<16x128xf32>
    %65 = arith.addf %38, %64 : vector<16x128xf32>
    %66 = arith.mulf %51, %59 : vector<16x128xf32>
    %67 = arith.addf %39, %66 : vector<16x128xf32>
    %c4 = arith.constant 4 : index
    %c0_20 = arith.constant 0 : index
    %68 = vector.load %arg3[%c4, %c0_20] : memref<8x128xf32, #tpu.memory_space<vmem>>, vector<1x128xf32>
    %69 = vector.shape_cast %68 : vector<1x128xf32> to vector<1x128xf32>
    %70 = vector.broadcast %69 : vector<1x128xf32> to vector<16x128xf32>
    %c5 = arith.constant 5 : index
    %c0_21 = arith.constant 0 : index
    %71 = vector.load %arg3[%c5, %c0_21] : memref<8x128xf32, #tpu.memory_space<vmem>>, vector<1x128xf32>
    %72 = vector.shape_cast %71 : vector<1x128xf32> to vector<1x128xf32>
    %73 = vector.broadcast %72 : vector<1x128xf32> to vector<16x128xf32>
    %c6 = arith.constant 6 : index
    %c0_22 = arith.constant 0 : index
    %74 = vector.load %arg3[%c6, %c0_22] : memref<8x128xf32, #tpu.memory_space<vmem>>, vector<1x128xf32>
    %75 = vector.shape_cast %74 : vector<1x128xf32> to vector<1x128xf32>
    %76 = vector.broadcast %75 : vector<1x128xf32> to vector<16x128xf32>
    %c7 = arith.constant 7 : index
    %c0_23 = arith.constant 0 : index
    %77 = vector.load %arg3[%c7, %c0_23] : memref<8x128xf32, #tpu.memory_space<vmem>>, vector<1x128xf32>
    %78 = vector.shape_cast %77 : vector<1x128xf32> to vector<1x128xf32>
    %79 = vector.broadcast %78 : vector<1x128xf32> to vector<16x128xf32>
    %80 = arith.mulf %70, %29 : vector<16x128xf32>
    %81 = arith.mulf %73, %31 : vector<16x128xf32>
    %82 = arith.addf %80, %81 : vector<16x128xf32>
    %83 = arith.mulf %76, %33 : vector<16x128xf32>
    %84 = arith.addf %82, %83 : vector<16x128xf32>
    %85 = arith.mulf %79, %35 : vector<16x128xf32>
    %86 = arith.addf %84, %85 : vector<16x128xf32>
    %87 = tpu.reciprocal %86 : vector<16x128xf32> -> vector<16x128xf32>
    %88 = arith.mulf %70, %87 : vector<16x128xf32>
    %89 = arith.addf %61, %88 : vector<16x128xf32>
    %90 = arith.mulf %73, %87 : vector<16x128xf32>
    %91 = arith.addf %63, %90 : vector<16x128xf32>
    %92 = arith.mulf %76, %87 : vector<16x128xf32>
    %93 = arith.addf %65, %92 : vector<16x128xf32>
    %94 = arith.mulf %79, %87 : vector<16x128xf32>
    %95 = arith.addf %67, %94 : vector<16x128xf32>
    %96 = arith.mulf %29, %89 : vector<16x128xf32>
    %97 = vector.extract_strided_slice %6 {offsets = [0, 640], sizes = [16, 128], strides = [1, 1]} : vector<16x1152xf32> to vector<16x128xf32>
    %98 = arith.mulf %96, %97 : vector<16x128xf32>
    %99 = vector.extract_strided_slice %6 {offsets = [0, 768], sizes = [16, 128], strides = [1, 1]} : vector<16x1152xf32> to vector<16x128xf32>
    %100 = arith.mulf %31, %91 : vector<16x128xf32>
    %101 = arith.mulf %100, %99 : vector<16x128xf32>
    %102 = arith.addf %98, %101 : vector<16x128xf32>
    %103 = vector.extract_strided_slice %6 {offsets = [0, 896], sizes = [16, 128], strides = [1, 1]} : vector<16x1152xf32> to vector<16x128xf32>
    %104 = arith.mulf %33, %93 : vector<16x128xf32>
    %105 = arith.mulf %104, %103 : vector<16x128xf32>
    %106 = arith.addf %102, %105 : vector<16x128xf32>
    %107 = vector.extract_strided_slice %6 {offsets = [0, 1024], sizes = [16, 128], strides = [1, 1]} : vector<16x1152xf32> to vector<16x128xf32>
    %108 = arith.mulf %35, %95 : vector<16x128xf32>
    %109 = arith.mulf %108, %107 : vector<16x128xf32>
    %110 = arith.addf %106, %109 : vector<16x128xf32>
    %111 = arith.truncf %110 : vector<16x128xf32> to vector<16x128xbf16>
    %c0_24 = arith.constant 0 : index
    %c0_25 = arith.constant 0 : index
    %112 = vector.load %arg6[%c0_24, %c0_25] : memref<128x128xbf16, #tpu.memory_space<vmem>>, vector<128x128xbf16>
    %cst_26 = arith.constant dense<0.000000e+00> : vector<16x128xf32>
    %113 = tpu.matmul %111, %112, %cst_26 {dimension_numbers = #tpu.dot_dimension_numbers<[1], [0], [0], [1], [0, 0, 1, 1], [], []>} : vector<16x128xbf16>, vector<128x128xbf16>, vector<16x128xf32> -> vector<16x128xf32>
    %c0_27 = arith.constant 0 : index
    %c0_28 = arith.constant 0 : index
    %114 = vector.load %arg7[%c0_27, %c0_28] : memref<16x128xf32, #tpu.memory_space<vmem>>, vector<16x128xf32>
    tpu.vector_store %arg7[%c0_27, %c0_28], %113 {strides = array<i32>} : memref<16x128xf32, #tpu.memory_space<vmem>>, vector<16x128xf32>,
    return
  }
  func.func @transform_0(%arg0: i32) -> (i32, i32) {
    %c0_i32 = arith.constant 0 : i32
    %c0_i32_0 = arith.constant 0 : i32
    return %arg0, %c0_i32 : i32, i32
  }
  func.func @transform_1(%arg0: i32) -> (i32, i32) {
    %c0_i32 = arith.constant 0 : i32
    %c0_i32_0 = arith.constant 0 : i32
    %c0_i32_1 = arith.constant 0 : i32
    return %c0_i32, %c0_i32_0 : i32, i32
  }
  func.func @transform_2(%arg0: i32) -> (i32, i32) {
    %c0_i32 = arith.constant 0 : i32
    %c0_i32_0 = arith.constant 0 : i32
    %c0_i32_1 = arith.constant 0 : i32
    return %c0_i32, %c0_i32_0 : i32, i32
  }
  func.func @transform_3(%arg0: i32) -> (i32, i32) {
    %c0_i32 = arith.constant 0 : i32
    %c0_i32_0 = arith.constant 0 : i32
    %c0_i32_1 = arith.constant 0 : i32
    return %c0_i32, %c0_i32_0 : i32, i32
  }
  func.func @transform_4(%arg0: i32) -> (i32, i32) {
    %c0_i32 = arith.constant 0 : i32
    %c0_i32_0 = arith.constant 0 : i32
    %c0_i32_1 = arith.constant 0 : i32
    return %c0_i32, %c0_i32_0 : i32, i32
  }
  func.func @transform_5(%arg0: i32) -> (i32, i32) {
    %c0_i32 = arith.constant 0 : i32
    %c0_i32_0 = arith.constant 0 : i32
    %c0_i32_1 = arith.constant 0 : i32
    return %c0_i32, %c0_i32_0 : i32, i32
  }
  func.func @transform_6(%arg0: i32) -> (i32, i32) {
    %c0_i32 = arith.constant 0 : i32
    %c0_i32_0 = arith.constant 0 : i32
    return %arg0, %c0_i32 : i32, i32
  }
}

</mosaic_0001>

<llo_original>
// kernel: shapely_attention_forward.1
$region0: #{shapely_attention_forward.1}
  #allocation0 [shape = 'u32[]', space=smem, size = 0x4, offset = 0x4, fixed_abs, tag = 'smem constant byte address 0x4 - core index']
  #allocation1 [shape = 'u32[72,128]{1,0:T(1,128)}', space=vmem, size = 0x9000, scoped, tag = 'internal scratch']
  %s0 = inlined_call_operand.vmem [shape: f32[16,128], index: 0, kind: input, shape index: {}]
  %s1 = inlined_call_operand.vmem [shape: f32[1,128], index: 1, kind: input, shape index: {}]
  %s2 = inlined_call_operand.vmem [shape: f32[8,128], index: 2, kind: input, shape index: {}]
  %s3 = inlined_call_operand.vmem [shape: bf16[128,1152], index: 3, kind: input, shape index: {}]
  %s4 = inlined_call_operand.vmem [shape: bf16[128,128], index: 4, kind: input, shape index: {}]
  %s5 = inlined_call_operand.vmem [shape: bf16[128,128], index: 5, kind: input, shape index: {}]
  %s6 = inlined_call_operand.vmem [shape: f32[16,128], index: 6, kind: output, shape index: {}]
  %s7 = sld [smem:[#allocation0]]
  $region34: #{shapely_attention_forward.1} parent=0
    _
  %s9 = ssub.s32 1, %s7
  %s10 = scalar_select 0, %s9, %s7
  // Predicated region
  $region2: #{shapely_attention_forward.1} parent=0 // pred_check
    _
  $region3: #{shapely_attention_forward.1} parent=0 // pred_check_branch
    %12 = sbr.rel (0) target = $region5
  $region4: #{shapely_attention_forward.1} parent=0 // pred_region
    _
  $region5: #{shapely_attention_forward.1} parent=0 // pred_fallthru
    _
  // Predicated region
  $region6: #{shapely_attention_forward.1} parent=0 // pred_check
    _
  $region7: #{shapely_attention_forward.1} parent=0 // pred_check_branch
    %14 = sbr.rel (0) target = $region9
  $region8: #{shapely_attention_forward.1} parent=0 // pred_region
    _
  $region9: #{shapely_attention_forward.1} parent=0 // pred_fallthru
    _
  // Predicated region
  $region10: #{shapely_attention_forward.1} parent=0 // pred_check
    _
  $region11: #{shapely_attention_forward.1} parent=0 // pred_check_branch
    %16 = sbr.rel (0) target = $region13
  $region12: #{shapely_attention_forward.1} parent=0 // pred_region
    _
  $region13: #{shapely_attention_forward.1} parent=0 // pred_fallthru
    _
  // Predicated region
  $region14: #{shapely_attention_forward.1} parent=0 // pred_check
    _
  $region15: #{shapely_attention_forward.1} parent=0 // pred_check_branch
    %18 = sbr.rel (0) target = $region17
  $region16: #{shapely_attention_forward.1} parent=0 // pred_region
    _
  $region17: #{shapely_attention_forward.1} parent=0 // pred_fallthru
    _
  // Predicated region
  $region18: #{shapely_attention_forward.1} parent=0 // pred_check
    _
  $region19: #{shapely_attention_forward.1} parent=0 // pred_check_branch
    %20 = sbr.rel (0) target = $region21
  $region20: #{shapely_attention_forward.1} parent=0 // pred_region
    _
  $region21: #{shapely_attention_forward.1} parent=0 // pred_fallthru
    _
  // Predicated region
  $region22: #{shapely_attention_forward.1} parent=0 // pred_check
    _
  $region23: #{shapely_attention_forward.1} parent=0 // pred_check_branch
    %22 = sbr.rel (0) target = $region25
  $region24: #{shapely_attention_forward.1} parent=0 // pred_region
    _
  $region25: #{shapely_attention_forward.1} parent=0 // pred_fallthru
    _
  %v23 = vld [vmem:[%s0] sm:$0xff]
  %v24 = vld [vmem:[%s0 + $0x8] sm:$0xff]
  %v25 = vld [vmem:[%s1] sm:$0x1]
  %v27 = vperm.slane %v25, 0
  %v29 = vadd.f32 %v23, %v27
  %v30 = vadd.f32 %v24, %v27
  %v31 = vpack.c.bf16 %v30, %v29
  %v32 = vld [vmem:[%s3] sm:$0xff]
  %v33 = vld [vmem:[%s3 + $0x8] sm:$0xff]
  %v34 = vld [vmem:[%s3 + $0x10] sm:$0xff]
  %v35 = vld [vmem:[%s3 + $0x18] sm:$0xff]
  %v36 = vld [vmem:[%s3 + $0x20] sm:$0xf]
  %v37 = vld [vmem:[%s3 + $0x24] sm:$0xff]
  %v38 = vld [vmem:[%s3 + $0x2c] sm:$0xff]
  %v39 = vld [vmem:[%s3 + $0x34] sm:$0xff]
  %v40 = vld [vmem:[%s3 + $0x3c] sm:$0xff]
  %v41 = vld [vmem:[%s3 + $0x44] sm:$0xf]
  %v42 = vld [vmem:[%s3 + $0x48] sm:$0xff]
  %v43 = vld [vmem:[%s3 + $0x50] sm:$0xff]
  %v44 = vld [vmem:[%s3 + $0x58] sm:$0xff]
  %v45 = vld [vmem:[%s3 + $0x60] sm:$0xff]
  %v46 = vld [vmem:[%s3 + $0x68] sm:$0xf]
  %v47 = vld [vmem:[%s3 + $0x6c] sm:$0xff]
  %v48 = vld [vmem:[%s3 + $0x74] sm:$0xff]
  %v49 = vld [vmem:[%s3 + $0x7c] sm:$0xff]
  %v50 = vld [vmem:[%s3 + $0x84] sm:$0xff]
  %v51 = vld [vmem:[%s3 + $0x8c] sm:$0xf]
  %v52 = vld [vmem:[%s3 + $0x90] sm:$0xff]
  %v53 = vld [vmem:[%s3 + $0x98] sm:$0xff]
  %v54 = vld [vmem:[%s3 + $0xa0] sm:$0xff]
  %v55 = vld [vmem:[%s3 + $0xa8] sm:$0xff]
  %v56 = vld [vmem:[%s3 + $0xb0] sm:$0xf]
  %v57 = vld [vmem:[%s3 + $0xb4] sm:$0xff]
  %v58 = vld [vmem:[%s3 + $0xbc] sm:$0xff]
  %v59 = vld [vmem:[%s3 + $0xc4] sm:$0xff]
  %v60 = vld [vmem:[%s3 + $0xcc] sm:$0xff]
  %v61 = vld [vmem:[%s3 + $0xd4] sm:$0xf]
  %v62 = vld [vmem:[%s3 + $0xd8] sm:$0xff]
  %v63 = vld [vmem:[%s3 + $0xe0] sm:$0xff]
  %v64 = vld [vmem:[%s3 + $0xe8] sm:$0xff]
  %v65 = vld [vmem:[%s3 + $0xf0] sm:$0xff]
  %v66 = vld [vmem:[%s3 + $0xf8] sm:$0xf]
  %v67 = vld [vmem:[%s3 + $0xfc] sm:$0xff]
  %v68 = vld [vmem:[%s3 + $0x104] sm:$0xff]
  %v69 = vld [vmem:[%s3 + $0x10c] sm:$0xff]
  %v70 = vld [vmem:[%s3 + $0x114] sm:$0xff]
  %v71 = vld [vmem:[%s3 + $0x11c] sm:$0xf]
  %v72 = vld [vmem:[%s3 + $0x120] sm:$0xff]
  %v73 = vld [vmem:[%s3 + $0x128] sm:$0xff]
  %v74 = vld [vmem:[%s3 + $0x130] sm:$0xff]
  %v75 = vld [vmem:[%s3 + $0x138] sm:$0xff]
  %v76 = vld [vmem:[%s3 + $0x140] sm:$0xf]
  %v77 = vld [vmem:[%s3 + $0x144] sm:$0xff]
  %v78 = vld [vmem:[%s3 + $0x14c] sm:$0xff]
  %v79 = vld [vmem:[%s3 + $0x154] sm:$0xff]
  %v80 = vld [vmem:[%s3 + $0x15c] sm:$0xff]
  %v81 = vld [vmem:[%s3 + $0x164] sm:$0xf]
  %v82 = vld [vmem:[%s3 + $0x168] sm:$0xff]
  %v83 = vld [vmem:[%s3 + $0x170] sm:$0xff]
  %v84 = vld [vmem:[%s3 + $0x178] sm:$0xff]
  %v85 = vld [vmem:[%s3 + $0x180] sm:$0xff]
  %v86 = vld [vmem:[%s3 + $0x188] sm:$0xf]
  %v87 = vld [vmem:[%s3 + $0x18c] sm:$0xff]
  %v88 = vld [vmem:[%s3 + $0x194] sm:$0xff]
  %v89 = vld [vmem:[%s3 + $0x19c] sm:$0xff]
  %v90 = vld [vmem:[%s3 + $0x1a4] sm:$0xff]
  %v91 = vld [vmem:[%s3 + $0x1ac] sm:$0xf]
  %v92 = vld [vmem:[%s3 + $0x1b0] sm:$0xff]
  %v93 = vld [vmem:[%s3 + $0x1b8] sm:$0xff]
  %v94 = vld [vmem:[%s3 + $0x1c0] sm:$0xff]
  %v95 = vld [vmem:[%s3 + $0x1c8] sm:$0xff]
  %v96 = vld [vmem:[%s3 + $0x1d0] sm:$0xf]
  %v97 = vld [vmem:[%s3 + $0x1d4] sm:$0xff]
  %v98 = vld [vmem:[%s3 + $0x1dc] sm:$0xff]
  %v99 = vld [vmem:[%s3 + $0x1e4] sm:$0xff]
  %v100 = vld [vmem:[%s3 + $0x1ec] sm:$0xff]
  %v101 = vld [vmem:[%s3 + $0x1f4] sm:$0xf]
  %v102 = vld [vmem:[%s3 + $0x1f8] sm:$0xff]
  %v103 = vld [vmem:[%s3 + $0x200] sm:$0xff]
  %v104 = vld [vmem:[%s3 + $0x208] sm:$0xff]
  %v105 = vld [vmem:[%s3 + $0x210] sm:$0xff]
  %v106 = vld [vmem:[%s3 + $0x218] sm:$0xf]
  %v107 = vld [vmem:[%s3 + $0x21c] sm:$0xff]
  %v108 = vld [vmem:[%s3 + $0x224] sm:$0xff]
  %v109 = vld [vmem:[%s3 + $0x22c] sm:$0xff]
  %v110 = vld [vmem:[%s3 + $0x234] sm:$0xff]
  %v111 = vld [vmem:[%s3 + $0x23c] sm:$0xf]
  %v192 = vunpack.c.l.b16 %v32
  %v193 = vunpack.c.h.b16 %v32
  %v194 = vunpack.c.l.b16 %v33
  %v195 = vunpack.c.h.b16 %v33
  %v196 = vunpack.c.l.b16 %v34
  %v197 = vunpack.c.h.b16 %v34
  %v198 = vunpack.c.l.b16 %v35
  %v199 = vunpack.c.h.b16 %v35
  %v200 = vunpack.c.l.b16 %v36
  %v201 = vunpack.c.l.b16 %v37
  %v202 = vunpack.c.h.b16 %v37
  %v203 = vunpack.c.l.b16 %v38
  %v204 = vunpack.c.h.b16 %v38
  %v205 = vunpack.c.l.b16 %v39
  %v206 = vunpack.c.h.b16 %v39
  %v207 = vunpack.c.l.b16 %v40
  %v208 = vunpack.c.h.b16 %v40
  %v209 = vunpack.c.l.b16 %v41
  %v210 = vunpack.c.l.b16 %v42
  %v211 = vunpack.c.h.b16 %v42
  %v212 = vunpack.c.l.b16 %v43
  %v213 = vunpack.c.h.b16 %v43
  %v214 = vunpack.c.l.b16 %v44
  %v215 = vunpack.c.h.b16 %v44
  %v216 = vunpack.c.l.b16 %v45
  %v217 = vunpack.c.h.b16 %v45
  %v218 = vunpack.c.l.b16 %v46
  %v219 = vunpack.c.l.b16 %v47
  %v220 = vunpack.c.h.b16 %v47
  %v221 = vunpack.c.l.b16 %v48
  %v222 = vunpack.c.h.b16 %v48
  %v223 = vunpack.c.l.b16 %v49
  %v224 = vunpack.c.h.b16 %v49
  %v225 = vunpack.c.l.b16 %v50
  %v226 = vunpack.c.h.b16 %v50
  %v227 = vunpack.c.l.b16 %v51
  %v228 = vunpack.c.l.b16 %v52
  %v229 = vunpack.c.h.b16 %v52
  %v230 = vunpack.c.l.b16 %v53
  %v231 = vunpack.c.h.b16 %v53
  %v232 = vunpack.c.l.b16 %v54
  %v233 = vunpack.c.h.b16 %v54
  %v234 = vunpack.c.l.b16 %v55
  %v235 = vunpack.c.h.b16 %v55
  %v236 = vunpack.c.l.b16 %v56
  %v237 = vunpack.c.l.b16 %v57
  %v238 = vunpack.c.h.b16 %v57
  %v239 = vunpack.c.l.b16 %v58
  %v240 = vunpack.c.h.b16 %v58
  %v241 = vunpack.c.l.b16 %v59
  %v242 = vunpack.c.h.b16 %v59
  %v243 = vunpack.c.l.b16 %v60
  %v244 = vunpack.c.h.b16 %v60
  %v245 = vunpack.c.l.b16 %v61
  %v246 = vunpack.c.l.b16 %v62
  %v247 = vunpack.c.h.b16 %v62
  %v248 = vunpack.c.l.b16 %v63
  %v249 = vunpack.c.h.b16 %v63
  %v250 = vunpack.c.l.b16 %v64
  %v251 = vunpack.c.h.b16 %v64
  %v252 = vunpack.c.l.b16 %v65
  %v253 = vunpack.c.h.b16 %v65
  %v254 = vunpack.c.l.b16 %v66
  %v255 = vunpack.c.l.b16 %v67
  %v256 = vunpack.c.h.b16 %v67
  %v257 = vunpack.c.l.b16 %v68
  %v258 = vunpack.c.h.b16 %v68
  %v259 = vunpack.c.l.b16 %v69
  %v260 = vunpack.c.h.b16 %v69
  %v261 = vunpack.c.l.b16 %v70
  %v262 = vunpack.c.h.b16 %v70
  %v263 = vunpack.c.l.b16 %v71
  %v264 = vunpack.c.l.b16 %v72
  %v265 = vunpack.c.h.b16 %v72
  %v266 = vunpack.c.l.b16 %v73
  %v267 = vunpack.c.h.b16 %v73
  %v268 = vunpack.c.l.b16 %v74
  %v269 = vunpack.c.h.b16 %v74
  %v270 = vunpack.c.l.b16 %v75
  %v271 = vunpack.c.h.b16 %v75
  %v272 = vunpack.c.l.b16 %v76
  %v273 = vunpack.c.l.b16 %v77
  %v274 = vunpack.c.h.b16 %v77
  %v275 = vunpack.c.l.b16 %v78
  %v276 = vunpack.c.h.b16 %v78
  %v277 = vunpack.c.l.b16 %v79
  %v278 = vunpack.c.h.b16 %v79
  %v279 = vunpack.c.l.b16 %v80
  %v280 = vunpack.c.h.b16 %v80
  %v281 = vunpack.c.l.b16 %v81
  %v282 = vunpack.c.l.b16 %v82
  %v283 = vunpack.c.h.b16 %v82
  %v284 = vunpack.c.l.b16 %v83
  %v285 = vunpack.c.h.b16 %v83
  %v286 = vunpack.c.l.b16 %v84
  %v287 = vunpack.c.h.b16 %v84
  %v288 = vunpack.c.l.b16 %v85
  %v289 = vunpack.c.h.b16 %v85
  %v290 = vunpack.c.l.b16 %v86
  %v291 = vunpack.c.l.b16 %v87
  %v292 = vunpack.c.h.b16 %v87
  %v293 = vunpack.c.l.b16 %v88
  %v294 = vunpack.c.h.b16 %v88
  %v295 = vunpack.c.l.b16 %v89
  %v296 = vunpack.c.h.b16 %v89
  %v297 = vunpack.c.l.b16 %v90
  %v298 = vunpack.c.h.b16 %v90
  %v299 = vunpack.c.l.b16 %v91
  %v300 = vunpack.c.l.b16 %v92
  %v301 = vunpack.c.h.b16 %v92
  %v302 = vunpack.c.l.b16 %v93
  %v303 = vunpack.c.h.b16 %v93
  %v304 = vunpack.c.l.b16 %v94
  %v305 = vunpack.c.h.b16 %v94
  %v306 = vunpack.c.l.b16 %v95
  %v307 = vunpack.c.h.b16 %v95
  %v308 = vunpack.c.l.b16 %v96
  %v309 = vunpack.c.l.b16 %v97
  %v310 = vunpack.c.h.b16 %v97
  %v311 = vunpack.c.l.b16 %v98
  %v312 = vunpack.c.h.b16 %v98
  %v313 = vunpack.c.l.b16 %v99
  %v314 = vunpack.c.h.b16 %v99
  %v315 = vunpack.c.l.b16 %v100
  %v316 = vunpack.c.h.b16 %v100
  %v317 = vunpack.c.l.b16 %v101
  %v318 = vunpack.c.l.b16 %v102
  %v319 = vunpack.c.h.b16 %v102
  %v320 = vunpack.c.l.b16 %v103
  %v321 = vunpack.c.h.b16 %v103
  %v322 = vunpack.c.l.b16 %v104
  %v323 = vunpack.c.h.b16 %v104
  %v324 = vunpack.c.l.b16 %v105
  %v325 = vunpack.c.h.b16 %v105
  %v326 = vunpack.c.l.b16 %v106
  %v327 = vunpack.c.l.b16 %v107
  %v328 = vunpack.c.h.b16 %v107
  %v329 = vunpack.c.l.b16 %v108
  %v330 = vunpack.c.h.b16 %v108
  %v331 = vunpack.c.l.b16 %v109
  %v332 = vunpack.c.h.b16 %v109
  %v333 = vunpack.c.l.b16 %v110
  %v334 = vunpack.c.h.b16 %v110
  %v335 = vunpack.c.l.b16 %v111
  %v336 = vpack.c.b16 %v201, %v192
  %v337 = vpack.c.b16 %v202, %v193
  %v338 = vpack.c.b16 %v203, %v194
  %v339 = vpack.c.b16 %v204, %v195
  %v340 = vpack.c.b16 %v205, %v196
  %v341 = vpack.c.b16 %v206, %v197
  %v342 = vpack.c.b16 %v207, %v198
  %v343 = vpack.c.b16 %v208, %v199
  %v344 = vpack.c.b16 %v209, %v200
  %v345 = vpack.c.b16 %v219, %v210
  %v346 = vpack.c.b16 %v220, %v211
  %v347 = vpack.c.b16 %v221, %v212
  %v348 = vpack.c.b16 %v222, %v213
  %v349 = vpack.c.b16 %v223, %v214
  %v350 = vpack.c.b16 %v224, %v215
  %v351 = vpack.c.b16 %v225, %v216
  %v352 = vpack.c.b16 %v226, %v217
  %v353 = vpack.c.b16 %v227, %v218
  %v354 = vpack.c.b16 %v237, %v228
  %v355 = vpack.c.b16 %v238, %v229
  %v356 = vpack.c.b16 %v239, %v230
  %v357 = vpack.c.b16 %v240, %v231
  %v358 = vpack.c.b16 %v241, %v232
  %v359 = vpack.c.b16 %v242, %v233
  %v360 = vpack.c.b16 %v243, %v234
  %v361 = vpack.c.b16 %v244, %v235
  %v362 = vpack.c.b16 %v245, %v236
  %v363 = vpack.c.b16 %v255, %v246
  %v364 = vpack.c.b16 %v256, %v247
  %v365 = vpack.c.b16 %v257, %v248
  %v366 = vpack.c.b16 %v258, %v249
  %v367 = vpack.c.b16 %v259, %v250
  %v368 = vpack.c.b16 %v260, %v251
  %v369 = vpack.c.b16 %v261, %v252
  %v370 = vpack.c.b16 %v262, %v253
  %v371 = vpack.c.b16 %v263, %v254
  %v372 = vpack.c.b16 %v273, %v264
  %v373 = vpack.c.b16 %v274, %v265
  %v374 = vpack.c.b16 %v275, %v266
  %v375 = vpack.c.b16 %v276, %v267
  %v376 = vpack.c.b16 %v277, %v268
  %v377 = vpack.c.b16 %v278, %v269
  %v378 = vpack.c.b16 %v279, %v270
  %v379 = vpack.c.b16 %v280, %v271
  %v380 = vpack.c.b16 %v281, %v272
  %v381 = vpack.c.b16 %v291, %v282
  %v382 = vpack.c.b16 %v292, %v283
  %v383 = vpack.c.b16 %v293, %v284
  %v384 = vpack.c.b16 %v294, %v285
  %v385 = vpack.c.b16 %v295, %v286
  %v386 = vpack.c.b16 %v296, %v287
  %v387 = vpack.c.b16 %v297, %v288
  %v388 = vpack.c.b16 %v298, %v289
  %v389 = vpack.c.b16 %v299, %v290
  %v390 = vpack.c.b16 %v309, %v300
  %v391 = vpack.c.b16 %v310, %v301
  %v392 = vpack.c.b16 %v311, %v302
  %v393 = vpack.c.b16 %v312, %v303
  %v394 = vpack.c.b16 %v313, %v304
  %v395 = vpack.c.b16 %v314, %v305
  %v396 = vpack.c.b16 %v315, %v306
  %v397 = vpack.c.b16 %v316, %v307
  %v398 = vpack.c.b16 %v317, %v308
  %v399 = vpack.c.b16 %v327, %v318
  %v400 = vpack.c.b16 %v328, %v319
  %v401 = vpack.c.b16 %v329, %v320
  %v402 = vpack.c.b16 %v330, %v321
  %v403 = vpack.c.b16 %v331, %v322
  %v404 = vpack.c.b16 %v332, %v323
  %v405 = vpack.c.b16 %v333, %v324
  %v406 = vpack.c.b16 %v334, %v325
  %v407 = vpack.c.b16 %v335, %v326
  %480 = vmatpush.bf16.msra.mxu0 %v399
  %481 = vmatpush.bf16.msra.mxu0 %v390
  %482 = vmatpush.bf16.msra.mxu0 %v381
  %483 = vmatpush.bf16.msra.mxu0 %v372
  %484 = vmatpush.bf16.msra.mxu0 %v363
  %485 = vmatpush.bf16.msra.mxu0 %v354
  %486 = vmatpush.bf16.msra.mxu0 %v345
  %487 = vmatpush.bf16.msra.mxu0 %v336
  %488 = vmatmul.bf16.gmra.mxu0 %v31
  %v489 = vpop.f32.mrf.mxu0
  %v490 = vadd.f32 0.0, %v489
  %v491 = vpop.f32.mrf.mxu0
  %v492 = vadd.f32 0.0, %v491
  %493 = vdwg.mxu0
  %494 = vmatpush.bf16.msra.mxu0 %v400
  %495 = vmatpush.bf16.msra.mxu0 %v391
  %496 = vmatpush.bf16.msra.mxu0 %v382
  %497 = vmatpush.bf16.msra.mxu0 %v373
  %498 = vmatpush.bf16.msra.mxu0 %v364
  %499 = vmatpush.bf16.msra.mxu0 %v355
  %500 = vmatpush.bf16.msra.mxu0 %v346
  %501 = vmatpush.bf16.msra.mxu0 %v337
  %502 = vmatmul.bf16.gmra.mxu0 %v31
  %v503 = vpop.f32.mrf.mxu0
  %v504 = vadd.f32 0.0, %v503
  %v505 = vpop.f32.mrf.mxu0
  %v506 = vadd.f32 0.0, %v505
  %507 = vdwg.mxu0
  %508 = vmatpush.bf16.msra.mxu0 %v401
  %509 = vmatpush.bf16.msra.mxu0 %v392
  %510 = vmatpush.bf16.msra.mxu0 %v383
  %511 = vmatpush.bf16.msra.mxu0 %v374
  %512 = vmatpush.bf16.msra.mxu0 %v365
  %513 = vmatpush.bf16.msra.mxu0 %v356
  %514 = vmatpush.bf16.msra.mxu0 %v347
  %515 = vmatpush.bf16.msra.mxu0 %v338
  %516 = vmatmul.bf16.gmra.mxu0 %v31
  %v517 = vpop.f32.mrf.mxu0
  %v518 = vadd.f32 0.0, %v517
  %v519 = vpop.f32.mrf.mxu0
  %v520 = vadd.f32 0.0, %v519
  %521 = vdwg.mxu0
  %522 = vmatpush.bf16.msra.mxu0 %v402
  %523 = vmatpush.bf16.msra.mxu0 %v393
  %524 = vmatpush.bf16.msra.mxu0 %v384
  %525 = vmatpush.bf16.msra.mxu0 %v375
  %526 = vmatpush.bf16.msra.mxu0 %v366
  %527 = vmatpush.bf16.msra.mxu0 %v357
  %528 = vmatpush.bf16.msra.mxu0 %v348
  %529 = vmatpush.bf16.msra.mxu0 %v339
  %530 = vmatmul.bf16.gmra.mxu0 %v31
  %v531 = vpop.f32.mrf.mxu0
  %v532 = vadd.f32 0.0, %v531
  %v533 = vpop.f32.mrf.mxu0
  %v534 = vadd.f32 0.0, %v533
  %535 = vdwg.mxu0
  %536 = vmatpush.bf16.msra.mxu0 %v403
  %537 = vmatpush.bf16.msra.mxu0 %v394
  %538 = vmatpush.bf16.msra.mxu0 %v385
  %539 = vmatpush.bf16.msra.mxu0 %v376
  %540 = vmatpush.bf16.msra.mxu0 %v367
  %541 = vmatpush.bf16.msra.mxu0 %v358
  %542 = vmatpush.bf16.msra.mxu0 %v349
  %543 = vmatpush.bf16.msra.mxu0 %v340
  %544 = vmatmul.bf16.gmra.mxu0 %v31
  %v545 = vpop.f32.mrf.mxu0
  %v546 = vadd.f32 0.0, %v545
  %v547 = vpop.f32.mrf.mxu0
  %v548 = vadd.f32 0.0, %v547
  %549 = vdwg.mxu0
  %550 = vmatpush.bf16.msra.mxu0 %v404
  %551 = vmatpush.bf16.msra.mxu0 %v395
  %552 = vmatpush.bf16.msra.mxu0 %v386
  %553 = vmatpush.bf16.msra.mxu0 %v377
  %554 = vmatpush.bf16.msra.mxu0 %v368
  %555 = vmatpush.bf16.msra.mxu0 %v359
  %556 = vmatpush.bf16.msra.mxu0 %v350
  %557 = vmatpush.bf16.msra.mxu0 %v341
  %558 = vmatmul.bf16.gmra.mxu0 %v31
  %v559 = vpop.f32.mrf.mxu0
  %v560 = vadd.f32 0.0, %v559
  %v561 = vpop.f32.mrf.mxu0
  %v562 = vadd.f32 0.0, %v561
  %563 = vdwg.mxu0
  %564 = vmatpush.bf16.msra.mxu0 %v405
  %565 = vmatpush.bf16.msra.mxu0 %v396
  %566 = vmatpush.bf16.msra.mxu0 %v387
  %567 = vmatpush.bf16.msra.mxu0 %v378
  %568 = vmatpush.bf16.msra.mxu0 %v369
  %569 = vmatpush.bf16.msra.mxu0 %v360
  %570 = vmatpush.bf16.msra.mxu0 %v351
  %571 = vmatpush.bf16.msra.mxu0 %v342
  %572 = vmatmul.bf16.gmra.mxu0 %v31
  %v573 = vpop.f32.mrf.mxu0
  %v574 = vadd.f32 0.0, %v573
  %v575 = vpop.f32.mrf.mxu0
  %v576 = vadd.f32 0.0, %v575
  %577 = vdwg.mxu0
  %578 = vmatpush.bf16.msra.mxu0 %v406
  %579 = vmatpush.bf16.msra.mxu0 %v397
  %580 = vmatpush.bf16.msra.mxu0 %v388
  %581 = vmatpush.bf16.msra.mxu0 %v379
  %582 = vmatpush.bf16.msra.mxu0 %v370
  %583 = vmatpush.bf16.msra.mxu0 %v361
  %584 = vmatpush.bf16.msra.mxu0 %v352
  %585 = vmatpush.bf16.msra.mxu0 %v343
  %586 = vmatmul.bf16.gmra.mxu0 %v31
  %v587 = vpop.f32.mrf.mxu0
  %v588 = vadd.f32 0.0, %v587
  %v589 = vpop.f32.mrf.mxu0
  %v590 = vadd.f32 0.0, %v589
  %591 = vdwg.mxu0
  %592 = vmatpush.bf16.msra.mxu0 %v407
  %593 = vmatpush.bf16.msra.mxu0 %v398
  %594 = vmatpush.bf16.msra.mxu0 %v389
  %595 = vmatpush.bf16.msra.mxu0 %v380
  %596 = vmatpush.bf16.msra.mxu0 %v371
  %597 = vmatpush.bf16.msra.mxu0 %v362
  %598 = vmatpush.bf16.msra.mxu0 %v353
  %599 = vmatpush.bf16.msra.mxu0 %v344
  %600 = vmatmul.bf16.gmra.mxu0 %v31
  %v601 = vpop.f32.mrf.mxu0
  %v602 = vadd.f32 0.0, %v601
  %v603 = vpop.f32.mrf.mxu0
  %v604 = vadd.f32 0.0, %v603
  %605 = vdwg.mxu0
  %v606 = vld [vmem:[%s4] sm:$0xf]
  %v607 = vld [vmem:[%s4 + $0x4] sm:$0xf]
  %v608 = vld [vmem:[%s4 + $0x8] sm:$0xf]
  %v609 = vld [vmem:[%s4 + $0xc] sm:$0xf]
  %v610 = vld [vmem:[%s4 + $0x10] sm:$0xf]
  %v611 = vld [vmem:[%s4 + $0x14] sm:$0xf]
  %v612 = vld [vmem:[%s4 + $0x18] sm:$0xf]
  %v613 = vld [vmem:[%s4 + $0x1c] sm:$0xf]
  %v614 = vld [vmem:[%s4 + $0x20] sm:$0xf]
  %v615 = vld [vmem:[%s4 + $0x24] sm:$0xf]
  %v616 = vld [vmem:[%s4 + $0x28] sm:$0xf]
  %v617 = vld [vmem:[%s4 + $0x2c] sm:$0xf]
  %v618 = vld [vmem:[%s4 + $0x30] sm:$0xf]
  %v619 = vld [vmem:[%s4 + $0x34] sm:$0xf]
  %v620 = vld [vmem:[%s4 + $0x38] sm:$0xf]
  %v621 = vld [vmem:[%s4 + $0x3c] sm:$0xf]
  %v622 = vmul.f32 %v490, %v504
  %v623 = vmul.f32 %v492, %v506
  %v624 = vpack.c.bf16 %v623, %v622
  %v641 = vunpack.c.l.b16 %v606
  %v642 = vunpack.c.l.b16 %v607
  %v643 = vunpack.c.l.b16 %v608
  %v644 = vunpack.c.l.b16 %v609
  %v645 = vunpack.c.l.b16 %v610
  %v646 = vunpack.c.l.b16 %v611
  %v647 = vunpack.c.l.b16 %v612
  %v648 = vunpack.c.l.b16 %v613
  %v649 = vunpack.c.l.b16 %v614
  %v650 = vunpack.c.l.b16 %v615
  %v651 = vunpack.c.l.b16 %v616
  %v652 = vunpack.c.l.b16 %v617
  %v653 = vunpack.c.l.b16 %v618
  %v654 = vunpack.c.l.b16 %v619
  %v655 = vunpack.c.l.b16 %v620
  %v656 = vunpack.c.l.b16 %v621
  %v657 = vpack.c.b16 %v642, %v641
  %v658 = vpack.c.b16 %v644, %v643
  %v659 = vpack.c.b16 %v646, %v645
  %v660 = vpack.c.b16 %v648, %v647
  %v661 = vpack.c.b16 %v650, %v649
  %v662 = vpack.c.b16 %v652, %v651
  %v663 = vpack.c.b16 %v654, %v653
  %v664 = vpack.c.b16 %v656, %v655
  %673 = vmatpush.bf16.msra.mxu0 %v664
  %674 = vmatpush.bf16.msra.mxu0 %v663
  %675 = vmatpush.bf16.msra.mxu0 %v662
  %676 = vmatpush.bf16.msra.mxu0 %v661
  %677 = vmatpush.bf16.msra.mxu0 %v660
  %678 = vmatpush.bf16.msra.mxu0 %v659
  %679 = vmatpush.bf16.msra.mxu0 %v658
  %680 = vmatpush.bf16.msra.mxu0 %v657
  %681 = vmatmul.bf16.gmra.mxu0 %v624
  %v682 = vpop.f32.mrf.mxu0
  %v683 = vadd.f32 0.0, %v682
  %v684 = vpop.f32.mrf.mxu0
  %v685 = vadd.f32 0.0, %v684
  %686 = vdwg.mxu0
  %v687 = vmul.f32 %v490, %v518
  %v688 = vmul.f32 %v492, %v520
  %v689 = vpack.c.bf16 %v688, %v687
  %690 = vmatpush.bf16.msra.mxu0 %v664
  %691 = vmatpush.bf16.msra.mxu0 %v663
  %692 = vmatpush.bf16.msra.mxu0 %v662
  %693 = vmatpush.bf16.msra.mxu0 %v661
  %694 = vmatpush.bf16.msra.mxu0 %v660
  %695 = vmatpush.bf16.msra.mxu0 %v659
  %696 = vmatpush.bf16.msra.mxu0 %v658
  %697 = vmatpush.bf16.msra.mxu0 %v657
  %698 = vmatmul.bf16.gmra.mxu0 %v689
  %v699 = vpop.f32.mrf.mxu0
  %v700 = vadd.f32 0.0, %v699
  %v701 = vpop.f32.mrf.mxu0
  %v702 = vadd.f32 0.0, %v701
  %703 = vdwg.mxu0
  %v704 = vmul.f32 %v490, %v532
  %v705 = vmul.f32 %v492, %v534
  %v706 = vpack.c.bf16 %v705, %v704
  %707 = vmatpush.bf16.msra.mxu0 %v664
  %708 = vmatpush.bf16.msra.mxu0 %v663
  %709 = vmatpush.bf16.msra.mxu0 %v662
  %710 = vmatpush.bf16.msra.mxu0 %v661
  %711 = vmatpush.bf16.msra.mxu0 %v660
  %712 = vmatpush.bf16.msra.mxu0 %v659
  %713 = vmatpush.bf16.msra.mxu0 %v658
  %714 = vmatpush.bf16.msra.mxu0 %v657
  %715 = vmatmul.bf16.gmra.mxu0 %v706
  %v716 = vpop.f32.mrf.mxu0
  %v717 = vadd.f32 0.0, %v716
  %v718 = vpop.f32.mrf.mxu0
  %v719 = vadd.f32 0.0, %v718
  %720 = vdwg.mxu0
  %v721 = vmul.f32 %v490, %v546
  %v722 = vmul.f32 %v492, %v548
  %v723 = vpack.c.bf16 %v722, %v721
  %724 = vmatpush.bf16.msra.mxu0 %v664
  %725 = vmatpush.bf16.msra.mxu0 %v663
  %726 = vmatpush.bf16.msra.mxu0 %v662
  %727 = vmatpush.bf16.msra.mxu0 %v661
  %728 = vmatpush.bf16.msra.mxu0 %v660
  %729 = vmatpush.bf16.msra.mxu0 %v659
  %730 = vmatpush.bf16.msra.mxu0 %v658
  %731 = vmatpush.bf16.msra.mxu0 %v657
  %732 = vmatmul.bf16.gmra.mxu0 %v723
  %v733 = vpop.f32.mrf.mxu0
  %v734 = vadd.f32 0.0, %v733
  %v735 = vpop.f32.mrf.mxu0
  %v736 = vadd.f32 0.0, %v735
  %737 = vdwg.mxu0
  %v738 = vmax.f32 %v683, %v700
  %v739 = vmax.f32 %v685, %v702
  %v740 = vmax.f32 %v738, %v717
  %v741 = vmax.f32 %v739, %v719
  %v742 = vmax.f32 %v740, %v734
  %v743 = vmax.f32 %v741, %v736
  %v744 = vsub.f32 %v683, %v742
  %v745 = vsub.f32 %v685, %v743
  %v746 = vmul.f32 %v744, 1.442695
  %v747 = vpow.pop %v746
  %v748 = vmul.f32 %v745, 1.442695
  %v749 = vpow.pop %v748
  %v750 = vsub.f32 %v700, %v742
  %v751 = vsub.f32 %v702, %v743
  %v752 = vmul.f32 %v750, 1.442695
  %v753 = vpow.pop %v752
  %v754 = vmul.f32 %v751, 1.442695
  %v755 = vpow.pop %v754
  %v756 = vsub.f32 %v717, %v742
  %v757 = vsub.f32 %v719, %v743
  %v758 = vmul.f32 %v756, 1.442695
  %v759 = vpow.pop %v758
  %v760 = vmul.f32 %v757, 1.442695
  %v761 = vpow.pop %v760
  %v762 = vsub.f32 %v734, %v742
  %v763 = vsub.f32 %v736, %v743
  %v764 = vmul.f32 %v762, 1.442695
  %v765 = vpow.pop %v764
  %v766 = vmul.f32 %v763, 1.442695
  %v767 = vpow.pop %v766
  %v768 = vld [vmem:[%s2] sm:$0x1]
  %v769 = vperm.slane %v768, 0
  %v770 = vld [vmem:[%s2 + $0x1] sm:$0x1]
  %v771 = vperm.slane %v770, 0
  %v772 = vld [vmem:[%s2 + $0x2] sm:$0x1]
  %v773 = vperm.slane %v772, 0
  %v774 = vld [vmem:[%s2 + $0x3] sm:$0x1]
  %v775 = vperm.slane %v774, 0
  %v776 = vmul.f32 %v769, %v747
  %v777 = vmul.f32 %v769, %v749
  %v778 = vmul.f32 %v771, %v753
  %v779 = vmul.f32 %v771, %v755
  %v780 = vadd.f32 %v776, %v778
  %v781 = vadd.f32 %v777, %v779
  %v782 = vmul.f32 %v773, %v759
  %v783 = vmul.f32 %v773, %v761
  %v784 = vadd.f32 %v780, %v782
  %v785 = vadd.f32 %v781, %v783
  %v786 = vmul.f32 %v775, %v765
  %v787 = vmul.f32 %v775, %v767
  %v788 = vadd.f32 %v784, %v786
  %v789 = vadd.f32 %v785, %v787
  %v790 = vrcp.pop %v788
  %v791 = vmul.f32 %v788, %v790
  %v792 = vsub.f32 1.0, %v791
  %v793 = vmul.f32 %v790, %v792
  %v794 = vadd.f32 %v790, %v793
  %vm795 = vweird.f32 %v788
  %vm796 = vweird.f32 %v790
  %vm797 = vmor %vm795, %vm796
  %v798 = vsel %vm797, %v790, %v794
  %v799 = vand.u32 2147483647, %v788
  %vm800 = vcmp.eq.f32.partialorder %v799, 8.507059e+37
  %v801 = vand.u32 %v788, 2147483648
  %v802 = vor.u32 1.1754944e-38, %v801
  %v803 = vsel %vm800, %v802, %v798
  %v804 = vrcp.pop %v789
  %v805 = vmul.f32 %v789, %v804
  %v806 = vsub.f32 1.0, %v805
  %v807 = vmul.f32 %v804, %v806
  %v808 = vadd.f32 %v804, %v807
  %vm809 = vweird.f32 %v789
  %vm810 = vweird.f32 %v804
  %vm811 = vmor %vm809, %vm810
  %v812 = vsel %vm811, %v804, %v808
  %v813 = vand.u32 2147483647, %v789
  %vm814 = vcmp.eq.f32.partialorder %v813, 8.507059e+37
  %v815 = vand.u32 %v789, 2147483648
  %v816 = vor.u32 1.1754944e-38, %v815
  %v817 = vsel %vm814, %v816, %v812
  %v818 = vmul.f32 %v769, %v803
  %v819 = vmul.f32 %v769, %v817
  %v820 = vadd.f32 %v818, 0.0
  %v821 = vadd.f32 %v819, 0.0
  %v822 = vmul.f32 %v771, %v803
  %v823 = vmul.f32 %v771, %v817
  %v824 = vadd.f32 %v822, 0.0
  %v825 = vadd.f32 %v823, 0.0
  %v826 = vmul.f32 %v773, %v803
  %v827 = vmul.f32 %v773, %v817
  %v828 = vadd.f32 %v826, 0.0
  %v829 = vadd.f32 %v827, 0.0
  %v830 = vmul.f32 %v775, %v803
  %v831 = vmul.f32 %v775, %v817
  %v832 = vadd.f32 %v830, 0.0
  %v833 = vadd.f32 %v831, 0.0
  %v834 = vld [vmem:[%s2 + $0x4] sm:$0x1]
  %v835 = vperm.slane %v834, 0
  %v836 = vld [vmem:[%s2 + $0x5] sm:$0x1]
  %v837 = vperm.slane %v836, 0
  %v838 = vld [vmem:[%s2 + $0x6] sm:$0x1]
  %v839 = vperm.slane %v838, 0
  %v840 = vld [vmem:[%s2 + $0x7] sm:$0x1]
  %v841 = vperm.slane %v840, 0
  %v842 = vmul.f32 %v835, %v747
  %v843 = vmul.f32 %v835, %v749
  %v844 = vmul.f32 %v837, %v753
  %v845 = vmul.f32 %v837, %v755
  %v846 = vadd.f32 %v842, %v844
  %v847 = vadd.f32 %v843, %v845
  %v848 = vmul.f32 %v839, %v759
  %v849 = vmul.f32 %v839, %v761
  %v850 = vadd.f32 %v846, %v848
  %v851 = vadd.f32 %v847, %v849
  %v852 = vmul.f32 %v841, %v765
  %v853 = vmul.f32 %v841, %v767
  %v854 = vadd.f32 %v850, %v852
  %v855 = vadd.f32 %v851, %v853
  %v856 = vrcp.pop %v854
  %v857 = vmul.f32 %v854, %v856
  %v858 = vsub.f32 1.0, %v857
  %v859 = vmul.f32 %v856, %v858
  %v860 = vadd.f32 %v856, %v859
  %vm861 = vweird.f32 %v854
  %vm862 = vweird.f32 %v856
  %vm863 = vmor %vm861, %vm862
  %v864 = vsel %vm863, %v856, %v860
  %v865 = vand.u32 2147483647, %v854
  %vm866 = vcmp.eq.f32.partialorder %v865, 8.507059e+37
  %v867 = vand.u32 %v854, 2147483648
  %v868 = vor.u32 1.1754944e-38, %v867
  %v869 = vsel %vm866, %v868, %v864
  %v870 = vrcp.pop %v855
  %v871 = vmul.f32 %v855, %v870
  %v872 = vsub.f32 1.0, %v871
  %v873 = vmul.f32 %v870, %v872
  %v874 = vadd.f32 %v870, %v873
  %vm875 = vweird.f32 %v855
  %vm876 = vweird.f32 %v870
  %vm877 = vmor %vm875, %vm876
  %v878 = vsel %vm877, %v870, %v874
  %v879 = vand.u32 2147483647, %v855
  %vm880 = vcmp.eq.f32.partialorder %v879, 8.507059e+37
  %v881 = vand.u32 %v855, 2147483648
  %v882 = vor.u32 1.1754944e-38, %v881
  %v883 = vsel %vm880, %v882, %v878
  %v884 = vmul.f32 %v835, %v869
  %v885 = vmul.f32 %v835, %v883
  %v886 = vadd.f32 %v820, %v884
  %v887 = vadd.f32 %v821, %v885
  %v888 = vmul.f32 %v837, %v869
  %v889 = vmul.f32 %v837, %v883
  %v890 = vadd.f32 %v824, %v888
  %v891 = vadd.f32 %v825, %v889
  %v892 = vmul.f32 %v839, %v869
  %v893 = vmul.f32 %v839, %v883
  %v894 = vadd.f32 %v828, %v892
  %v895 = vadd.f32 %v829, %v893
  %v896 = vmul.f32 %v841, %v869
  %v897 = vmul.f32 %v841, %v883
  %v898 = vadd.f32 %v832, %v896
  %v899 = vadd.f32 %v833, %v897
  %v900 = vmul.f32 %v747, %v886
  %v901 = vmul.f32 %v749, %v887
  %v902 = vmul.f32 %v900, %v560
  %v903 = vmul.f32 %v901, %v562
  %v904 = vmul.f32 %v753, %v890
  %v905 = vmul.f32 %v755, %v891
  %v906 = vmul.f32 %v904, %v574
  %v907 = vmul.f32 %v905, %v576
  %v908 = vadd.f32 %v902, %v906
  %v909 = vadd.f32 %v903, %v907
  %v910 = vmul.f32 %v759, %v894
  %v911 = vmul.f32 %v761, %v895
  %v912 = vmul.f32 %v910, %v588
  %v913 = vmul.f32 %v911, %v590
  %v914 = vadd.f32 %v908, %v912
  %v915 = vadd.f32 %v909, %v913
  %v916 = vmul.f32 %v765, %v898
  %v917 = vmul.f32 %v767, %v899
  %v918 = vmul.f32 %v916, %v602
  %v919 = vmul.f32 %v917, %v604
  %v920 = vadd.f32 %v914, %v918
  %v921 = vadd.f32 %v915, %v919
  %v922 = vpack.c.bf16 %v921, %v920
  %v923 = vld [vmem:[%s5] sm:$0xf]
  %v924 = vld [vmem:[%s5 + $0x4] sm:$0xf]
  %v925 = vld [vmem:[%s5 + $0x8] sm:$0xf]
  %v926 = vld [vmem:[%s5 + $0xc] sm:$0xf]
  %v927 = vld [vmem:[%s5 + $0x10] sm:$0xf]
  %v928 = vld [vmem:[%s5 + $0x14] sm:$0xf]
  %v929 = vld [vmem:[%s5 + $0x18] sm:$0xf]
  %v930 = vld [vmem:[%s5 + $0x1c] sm:$0xf]
  %v931 = vld [vmem:[%s5 + $0x20] sm:$0xf]
  %v932 = vld [vmem:[%s5 + $0x24] sm:$0xf]
  %v933 = vld [vmem:[%s5 + $0x28] sm:$0xf]
  %v934 = vld [vmem:[%s5 + $0x2c] sm:$0xf]
  %v935 = vld [vmem:[%s5 + $0x30] sm:$0xf]
  %v936 = vld [vmem:[%s5 + $0x34] sm:$0xf]
  %v937 = vld [vmem:[%s5 + $0x38] sm:$0xf]
  %v938 = vld [vmem:[%s5 + $0x3c] sm:$0xf]
  %v955 = vunpack.c.l.b16 %v923
  %v956 = vunpack.c.l.b16 %v924
  %v957 = vunpack.c.l.b16 %v925
  %v958 = vunpack.c.l.b16 %v926
  %v959 = vunpack.c.l.b16 %v927
  %v960 = vunpack.c.l.b16 %v928
  %v961 = vunpack.c.l.b16 %v929
  %v962 = vunpack.c.l.b16 %v930
  %v963 = vunpack.c.l.b16 %v931
  %v964 = vunpack.c.l.b16 %v932
  %v965 = vunpack.c.l.b16 %v933
  %v966 = vunpack.c.l.b16 %v934
  %v967 = vunpack.c.l.b16 %v935
  %v968 = vunpack.c.l.b16 %v936
  %v969 = vunpack.c.l.b16 %v937
  %v970 = vunpack.c.l.b16 %v938
  %v971 = vpack.c.b16 %v956, %v955
  %v972 = vpack.c.b16 %v958, %v957
  %v973 = vpack.c.b16 %v960, %v959
  %v974 = vpack.c.b16 %v962, %v961
  %v975 = vpack.c.b16 %v964, %v963
  %v976 = vpack.c.b16 %v966, %v965
  %v977 = vpack.c.b16 %v968, %v967
  %v978 = vpack.c.b16 %v970, %v969
  %987 = vmatpush.bf16.msra.mxu0 %v978
  %988 = vmatpush.bf16.msra.mxu0 %v977
  %989 = vmatpush.bf16.msra.mxu0 %v976
  %990 = vmatpush.bf16.msra.mxu0 %v975
  %991 = vmatpush.bf16.msra.mxu0 %v974
  %992 = vmatpush.bf16.msra.mxu0 %v973
  %993 = vmatpush.bf16.msra.mxu0 %v972
  %994 = vmatpush.bf16.msra.mxu0 %v971
  %995 = vmatmul.bf16.gmra.mxu0 %v922
  %v996 = vpop.f32.mrf.mxu0
  %v997 = vadd.f32 0.0, %v996
  %v998 = vpop.f32.mrf.mxu0
  %v999 = vadd.f32 0.0, %v998
  %1000 = vdwg.mxu0
  %1001 = vst [vmem:[%s6] sm:$0xff] %v997
  %1002 = vst [vmem:[%s6 + $0x8] sm:$0xff] %v999
  // Predicated region
  $region26: #{shapely_attention_forward.1} parent=0 // pred_check
    _
  $region27: #{shapely_attention_forward.1} parent=0 // pred_check_branch
    %1004 = sbr.rel (0) target = $region29
  $region28: #{shapely_attention_forward.1} parent=0 // pred_region
    _
  $region29: #{shapely_attention_forward.1} parent=0 // pred_fallthru
    _
  // Predicated region
  $region30: #{shapely_attention_forward.1} parent=0 // pred_check
    _
  $region31: #{shapely_attention_forward.1} parent=0 // pred_check_branch
    %1006 = sbr.rel (0) target = $region33
  $region32: #{shapely_attention_forward.1} parent=0 // pred_region
    _
  $region33: #{shapely_attention_forward.1} parent=0 // pred_fallthru
    _

</llo_original>
